<compile_context>
chip_gen: v7x
topology: tpu7x:2x2x1
jax: 0.10.0
libtpu: 0.0.40
codegen_flags: <defaults>
</compile_context>

<pallas_src>
import jax
import jax.numpy as jnp
from jax.experimental import pallas as pl
from jax.experimental.pallas import tpu as pltpu


def _clip_add_kernel(val_ref, x_ref, o_ref):
    # val_ref: (1,) f32 scalar in SMEM; x_ref / o_ref: (br, lane) VMEM tiles.
    v = val_ref[0].astype(x_ref.dtype)
    o_ref[...] = jnp.clip(x_ref[...] + v, 0.0, 1.0)


def clipped_constant_transform(x, val, *, force_pallas=False,
                               target_block_bytes=2 << 20):
    """Pallas equivalent of torch.clamp(x + val, min=0.0, max=1.0)."""
    orig_shape = x.shape
    dtype = x.dtype
    n = x.size
    itemsize = jnp.dtype(dtype).itemsize

    def _xla_fallback():
        return jnp.clip(x + jnp.asarray(val, dtype), 0.0, 1.0)

    # Fast path: pallas_call launch/pipeline overhead dominates tiny tensors;
    # XLA's fused elementwise op is already at the HBM roofline there.
    if not force_pallas and n * itemsize < (1 << 20):
        return _xla_fallback()

    # Pick the widest lane-dense last dim that divides n (prefer rows >= 8).
    lane = None
    for cand in (4096, 2048, 1024, 512, 256, 128):
        if n % cand == 0 and n // cand >= 8:
            lane = cand
            break
    if lane is None:
        for cand in (4096, 2048, 1024, 512, 256, 128):
            if n % cand == 0:
                lane = cand
                break
    if lane is None:
        # n not a multiple of 128: skip the kernel rather than paying an extra
        # pad + slice HBM pass for a bandwidth-bound, zero-FLOP op.
        return _xla_fallback()

    rows = n // lane
    x2d = x.reshape(rows, lane)

    # Block sizing: ~2 MiB blocks (near the measured 85% HBM-roofline plateau),
    # sublane-aligned rows, no divisibility requirement thanks to the cdiv grid
    # with a masked partial last block. 2 bufs * (in + out) * 2 MiB = 8 MiB,
    # comfortably under the default scoped VMEM on v5e / v6e / v7x.
    if rows <= 8:
        br = rows  # full extent (always a legal block shape)
    else:
        br = min(rows, max(8, target_block_bytes // (lane * itemsize)))
        br -= br % 8
        if pl.cdiv(rows, br) < 2:
            # Split into >= 2 grid steps so both v7x TensorCores get work.
            half = -(-((rows + 1) // 2) // 8) * 8
            br = max(8, min(br, half))

    grid = (pl.cdiv(rows, br),)
    val_arr = jnp.asarray([val], dtype=jnp.float32)

    out2d = pl.pallas_call(
        _clip_add_kernel,
        out_shape=jax.ShapeDtypeStruct((rows, lane), dtype),
        grid_spec=pltpu.PrefetchScalarGridSpec(
            num_scalar_prefetch=0,
            grid=grid,
            in_specs=[
                pl.BlockSpec(memory_space=pltpu.MemorySpace.SMEM),  # val scalar
                pl.BlockSpec((br, lane), lambda i: (i, 0)),
            ],
            out_specs=pl.BlockSpec((br, lane), lambda i: (i, 0)),
        ),
        compiler_params=pltpu.CompilerParams(
            dimension_semantics=("parallel",),
        ),
    )(val_arr, x2d)

    return out2d.reshape(orig_shape)


if __name__ == "__main__":
    key0, key1 = jax.random.split(jax.random.PRNGKey(0), 2)
    val = 0.3  # the constant from the module's __init__

    # Primary small NCHW test shape implied by the module's usage.
    x_small = jax.random.normal(key0, (2, 4, 16, 16), dtype=jnp.float32) * 2.0

    # Slightly larger, awkward shape: exercises the cdiv grid with a partial
    # last block and >= 2 grid steps.
    x_big = jax.random.normal(key1, (3, 8, 56, 72), dtype=jnp.float32) * 2.0

    for x in (x_small, x_big):
        out = clipped_constant_transform(x, val, force_pallas=True)
        out = jax.block_until_ready(out)
        ref = jnp.clip(x + val, 0.0, 1.0)
        assert out.shape == x.shape and out.dtype == x.dtype
        assert jnp.allclose(out, ref, atol=1e-6), "mismatch vs reference"

    # Default path (tiny-input fast path) must also stay correct.
    out_fast = jax.block_until_ready(clipped_constant_transform(x_small, val))
    assert jnp.allclose(out_fast, jnp.clip(x_small + val, 0.0, 1.0), atol=1e-6)

    print("KERNEL_OK")
</pallas_src>

<mosaic_0001>
module attributes {stable_mosaic.version = 11 : i64} {
  func.func @_clip_add_kernel(%arg0: i32, %arg1: memref<1xf32, #tpu.memory_space<smem>>, %arg2: memref<8x256xf32, #tpu.memory_space<vmem>>, %arg3: memref<8x256xf32, #tpu.memory_space<vmem>>) attributes {dimension_semantics = [#tpu.dimension_semantics<parallel>], iteration_bounds = array<i64: 1>, scalar_prefetch = 0 : i64, scratch_operands = 0 : i64, tpu.core_type = #tpu.core_type<tc>, window_params = [{transform_indices = @transform_0, window_bounds = array<i64: 1>}, {transform_indices = @transform_1, window_bounds = array<i64: 8, 256>}, {transform_indices = @transform_2, window_bounds = array<i64: 8, 256>}]} {
    %c0 = arith.constant 0 : index
    %0 = memref.load %arg1[%c0] : memref<1xf32, #tpu.memory_space<smem>>
    %c0_0 = arith.constant 0 : index
    %c0_1 = arith.constant 0 : index
    %1 = vector.load %arg2[%c0_0, %c0_1] : memref<8x256xf32, #tpu.memory_space<vmem>>, vector<8x256xf32>
    %2 = vector.broadcast %0 : f32 to vector<8x256xf32>
    %3 = arith.addf %1, %2 : vector<8x256xf32>
    %cst = arith.constant 0.000000e+00 : f32
    %cst_2 = arith.constant 1.000000e+00 : f32
    %4 = vector.broadcast %cst : f32 to vector<8x256xf32>
    %5 = arith.maximumf %4, %3 : vector<8x256xf32>
    %6 = vector.broadcast %cst_2 : f32 to vector<8x256xf32>
    %7 = arith.minimumf %6, %5 : vector<8x256xf32>
    %c0_3 = arith.constant 0 : index
    %c0_4 = arith.constant 0 : index
    %8 = vector.load %arg3[%c0_3, %c0_4] : memref<8x256xf32, #tpu.memory_space<vmem>>, vector<8x256xf32>
    tpu.vector_store %arg3[%c0_3, %c0_4], %7 {strides = array<i32>} : memref<8x256xf32, #tpu.memory_space<vmem>>, vector<8x256xf32>,
    return
  }
  func.func @transform_0(%arg0: i32) -> i32 {
    %c0_i32 = arith.constant 0 : i32
    %c0_i32_0 = arith.constant 0 : i32
    return %c0_i32 : i32
  }
  func.func @transform_1(%arg0: i32) -> (i32, i32) {
    %c0_i32 = arith.constant 0 : i32
    %c0_i32_0 = arith.constant 0 : i32
    return %arg0, %c0_i32 : i32, i32
  }
  func.func @transform_2(%arg0: i32) -> (i32, i32) {
    %c0_i32 = arith.constant 0 : i32
    %c0_i32_0 = arith.constant 0 : i32
    return %arg0, %c0_i32 : i32, i32
  }
}

</mosaic_0001>

<llo_original>
// kernel: tpu_custom_call.1
$region0: #{tpu_custom_call.1}
  #allocation0 [shape = 'u32[]', space=smem, size = 0x4, offset = 0x4, fixed_abs, tag = 'smem constant byte address 0x4 - core index']
  #allocation1 [shape = 'u32[144,128]{1,0:T(1,128)}', space=vmem, size = 0x12000, scoped, tag = 'internal scratch']
  #allocation2 [shape = 'f32[1]{0:T(128)S(6)}', space=smem, size = 0x200, scoped, tag = 'scoped memory for tpu_custom_call.1']
  %s0 = inlined_call_operand.<no memory space> [shape: f32[1], index: 0, kind: input, shape index: {}]
  %s1 = inlined_call_operand.hbm [shape: f32[8,256], index: 1, kind: input, shape index: {}]
  %s2 = inlined_call_operand.hbm [shape: f32[8,256], index: 2, kind: output, shape index: {}]
  %s3 = sld [smem:[#allocation0]]
  $region22: #{tpu_custom_call.1} parent=0
    _
  %s5 = ssub.s32 1, %s3
  %s6 = scalar_select 0, %s5, %s3
  %7 = sst [smem:[#allocation2]] %s0
  $region1: #{tpu_custom_call.1} parent=0
    #allocation3 [shape = 'u8[8192]{0}', space=vmem, size = 0x2000, scoped, tag = 'input window, operand 1, single buffered']
    #allocation4 [shape = 's32[1]{0}', space=sflag, size = 0x4, scoped, tag = 'scoped memory for tpu_custom_call.1']
    #allocation5 [shape = 's32[1]{0}', space=sflag, size = 0x4, scoped, tag = 'scoped memory for tpu_custom_call.1']
    #allocation6 [shape = 'u8[8192]{0}', space=vmem, size = 0x2000, scoped, tag = 'output window, operand 0, single buffered']
    %8 = vsyncpa [#allocation4], 0
    %9 = vsyncpa [#allocation5], 0
    // Predicated region
    $region2: #{tpu_custom_call.1} parent=1 // pred_check
      _
    $region3: #{tpu_custom_call.1} parent=1 // pred_check_branch
      %11 = sbr.rel (0) target = $region5
    $region4: #{tpu_custom_call.1} parent=1 // pred_region
      _
    $region5: #{tpu_custom_call.1} parent=1 // pred_fallthru
      _
    // Predicated region
    $region6: #{tpu_custom_call.1} parent=1 // pred_check
      _
    $region7: #{tpu_custom_call.1} parent=1 // pred_check_branch
      %13 = sbr.rel (0) target = $region9
    $region8: #{tpu_custom_call.1} parent=1 // pred_region
      %s15 = ssub.s32 256, 256
      %16 = vsyncadd [#allocation4], %s15
      %s18 = sshll.u32 [#allocation3], 4
      %s19 = int_to_ptr.vmem [resolvable:$true] %s18
      %21 = dma.hbm_to_vmem [thread:$0]  %s1, 256, %s19, [#allocation4]
    $region9: #{tpu_custom_call.1} parent=1 // pred_fallthru
      _
    // Predicated region
    $region10: #{tpu_custom_call.1} parent=1 // pred_check
      _
    $region11: #{tpu_custom_call.1} parent=1 // pred_check_branch
      %23 = sbr.rel (0) target = $region13
    $region12: #{tpu_custom_call.1} parent=1 // pred_region
      %24 = dma.done [#allocation4], 256
    $region13: #{tpu_custom_call.1} parent=1 // pred_fallthru
      _
    %s25 = sld [smem:[#allocation2]]
    %v26 = vld [vmem:[#allocation3] sm:$0xff]
    %v27 = vld [vmem:[#allocation3 + $0x8] sm:$0xff]
    %v28 = vstv %s25
    %v29 = vadd.f32 %v26, %v28
    %v30 = vadd.f32 %v27, %v28
    %v31 = vmax.f32 %v29, 0.0
    %v32 = vmax.f32 %v30, 0.0
    %v33 = vmin.f32 %v31, 1.0
    %v34 = vmin.f32 %v32, 1.0
    %35 = vst [vmem:[#allocation6] sm:$0xff] %v33
    %36 = vst [vmem:[#allocation6 + $0x8] sm:$0xff] %v34
    // Predicated region
    $region14: #{tpu_custom_call.1} parent=1 // pred_check
      _
    $region15: #{tpu_custom_call.1} parent=1 // pred_check_branch
      %38 = sbr.rel (0) target = $region17
    $region16: #{tpu_custom_call.1} parent=1 // pred_region
      %s40 = ssub.s32 256, 256
      %41 = vsyncadd [#allocation5], %s40
      %s43 = sshll.u32 [#allocation6], 4
      %s44 = int_to_ptr.vmem [resolvable:$true] %s43
      %46 = dma.vmem_to_hbm [thread:$0]  %s44, 256, %s2, [#allocation5]
    $region17: #{tpu_custom_call.1} parent=1 // pred_fallthru
      _
    // Predicated region
    $region18: #{tpu_custom_call.1} parent=1 // pred_check
      _
    $region19: #{tpu_custom_call.1} parent=1 // pred_check_branch
      %48 = sbr.rel (0) target = $region21
    $region20: #{tpu_custom_call.1} parent=1 // pred_region
      %49 = dma.done [#allocation5], 256
    $region21: #{tpu_custom_call.1} parent=1 // pred_fallthru
      _
    %50 = vsyncpa [#allocation4], 1
    %51 = vsyncpa [#allocation5], 1

</llo_original>
